<compile_context>
chip_gen: v5e
topology: v5e:2x2
jax: 0.10.0
libtpu: 0.0.40
codegen_flags: <defaults>
</compile_context>

<pallas_src>
import functools

import jax
import jax.numpy as jnp
from jax.experimental import pallas as pl
from jax.experimental.pallas import tpu as pltpu

INPUT_SIZE = 784
HIDDEN = 50
NUM_CLASSES = 10

HIDDEN_PAD = 64      # MXU/sublane-friendly hidden dim (zero-padded)
CLASSES_PAD = 128    # lane-dense output dim (zero-padded)


def _round_up(x, m):
    return ((x + m - 1) // m) * m


def mlp_kernel(x_ref, w1_ref, b1_ref, w2_ref, b2_ref, o_ref):
    # fc1: (TB, 784) @ (784, 64), f32 accumulation on the MXU.
    h = jnp.dot(x_ref[...], w1_ref[...], preferred_element_type=jnp.float32)
    h = jnp.maximum(h + b1_ref[...].astype(jnp.float32), 0.0)   # bias + ReLU
    # fc2: (TB, 64) @ (64, 128), f32 accumulation.
    y = jnp.dot(h.astype(w2_ref.dtype), w2_ref[...],
                preferred_element_type=jnp.float32)
    o_ref[...] = (y + b2_ref[...].astype(jnp.float32)).astype(o_ref.dtype)


def _select_batch_tile(B, tb_max):
    """Tile-count-aware TB: multiple of 16, padding bounded, >=2 tiles when B>=32."""
    min_tiles = 2 if B >= 32 else 1          # keep both v7x TCs busy when possible
    n_tiles = max(pl.cdiv(B, tb_max), min_tiles)
    TB = min(_round_up(pl.cdiv(B, n_tiles), 16), _round_up(tb_max, 16))
    Bp = _round_up(B, TB)
    return TB, Bp


@functools.partial(jax.jit, static_argnames=("num_classes", "tb_max", "return_padded"))
def nn_forward(x, w1p, b1p, w2p, b2p, *, num_classes=NUM_CLASSES, tb_max=1024,
               return_padded=False):
    """x: (B, 784). Padded params: w1p (784,64), b1p (1,64), w2p (64,128), b2p (1,128).

    Params should share x's dtype (f32 or bf16); accumulation is always f32.
    With return_padded=True, returns the lane-dense (Bp, 128) logits (padded
    class columns are zero-biased) so downstream can skip the slice pass.
    """
    B, in_features = x.shape
    H = w1p.shape[1]
    Npad = w2p.shape[1]

    TB, Bp = _select_batch_tile(B, tb_max)
    if Bp != B:
        x = jnp.pad(x, ((0, Bp - B), (0, 0)))
    grid = (Bp // TB,)

    in_bytes = x.dtype.itemsize
    out_dtype = x.dtype
    cost = pl.CostEstimate(
        flops=2 * Bp * in_features * H + 2 * Bp * H * Npad,
        transcendentals=0,
        bytes_accessed=(in_bytes * Bp * in_features
                        + w1p.dtype.itemsize * (in_features * H + H)
                        + w2p.dtype.itemsize * (H * Npad + Npad)
                        + jnp.dtype(out_dtype).itemsize * Bp * Npad),
    )

    out = pl.pallas_call(
        mlp_kernel,
        out_shape=jax.ShapeDtypeStruct((Bp, Npad), out_dtype),
        grid_spec=pl.GridSpec(
            grid=grid,
            in_specs=[
                pl.BlockSpec((TB, in_features), lambda i: (i, 0)),  # x: batch-tiled
                pl.BlockSpec((in_features, H), lambda i: (0, 0)),   # w1: VMEM-resident
                pl.BlockSpec((1, H), lambda i: (0, 0)),             # b1
                pl.BlockSpec((H, Npad), lambda i: (0, 0)),          # w2
                pl.BlockSpec((1, Npad), lambda i: (0, 0)),          # b2
            ],
            out_specs=pl.BlockSpec((TB, Npad), lambda i: (i, 0)),
        ),
        compiler_params=pltpu.CompilerParams(
            dimension_semantics=("parallel",),  # batch tiles shard across TCs on v7x
        ),
        cost_estimate=cost,
    )(x, w1p, b1p, w2p, b2p)

    if return_padded:
        return out
    # Strip batch padding and the lane-padding of the class dimension.
    return out[:B, :num_classes]


def init_params(key, input_size=INPUT_SIZE, hidden=HIDDEN, num_classes=NUM_CLASSES,
                param_dtype=jnp.float32):
    """PyTorch nn.Linear-style init (U(-1/sqrt(fan_in), +1/sqrt(fan_in))), then
    zero-pad once to MXU/lane-friendly shapes (hidden->64, classes->128) and cast
    the padded copies to `param_dtype` so the kernel never re-casts weights."""
    k1, k2, k3, k4 = jax.random.split(key, 4)
    bound1 = 1.0 / jnp.sqrt(input_size)
    bound2 = 1.0 / jnp.sqrt(hidden)
    w1 = jax.random.uniform(k1, (input_size, hidden), jnp.float32, -bound1, bound1)
    b1 = jax.random.uniform(k2, (1, hidden), jnp.float32, -bound1, bound1)
    w2 = jax.random.uniform(k3, (hidden, num_classes), jnp.float32, -bound2, bound2)
    b2 = jax.random.uniform(k4, (1, num_classes), jnp.float32, -bound2, bound2)

    hp = max(HIDDEN_PAD, _round_up(hidden, 8))
    cp = max(CLASSES_PAD, _round_up(num_classes, 128))
    w1p = jnp.pad(w1, ((0, 0), (0, hp - hidden))).astype(param_dtype)
    b1p = jnp.pad(b1, ((0, 0), (0, hp - hidden))).astype(param_dtype)
    w2p = jnp.pad(w2, ((0, hp - hidden), (0, cp - num_classes))).astype(param_dtype)
    b2p = jnp.pad(b2, ((0, 0), (0, cp - num_classes))).astype(param_dtype)
    return (w1, b1, w2, b2), (w1p, b1p, w2p, b2p)


if __name__ == "__main__":
    key = jax.random.PRNGKey(0)
    kx, kx2, kx3, kp = jax.random.split(key, 4)

    # f32 path: exact-parity params.
    (w1, b1, w2, b2), (w1p, b1p, w2p, b2p) = init_params(kp, param_dtype=jnp.float32)

    def ref_fwd(xr):
        return jnp.maximum(xr @ w1 + b1, 0.0) @ w2 + b2

    # Small batch (single tile).
    batch = 8
    x = jax.random.normal(kx, (batch, INPUT_SIZE), jnp.float32)
    out = jax.block_until_ready(nn_forward(x, w1p, b1p, w2p, b2p))
    assert out.shape == (batch, NUM_CLASSES)
    assert jnp.allclose(out, ref_fwd(x), atol=1e-4, rtol=1e-4), (
        float(jnp.max(jnp.abs(out - ref_fwd(x)))))

    # Ragged batch (exercises padding + tile selection).
    batch2 = 13
    x2 = jax.random.normal(kx2, (batch2, INPUT_SIZE), jnp.float32)
    out2 = jax.block_until_ready(nn_forward(x2, w1p, b1p, w2p, b2p))
    assert out2.shape == (batch2, NUM_CLASSES)
    assert jnp.allclose(out2, ref_fwd(x2), atol=1e-4, rtol=1e-4), (
        float(jnp.max(jnp.abs(out2 - ref_fwd(x2)))))

    # Multi-tile batch (grid >= 2 so both v7x TensorCores are used).
    batch3 = 48
    x3 = jax.random.normal(kx3, (batch3, INPUT_SIZE), jnp.float32)
    out3 = jax.block_until_ready(nn_forward(x3, w1p, b1p, w2p, b2p))
    assert out3.shape == (batch3, NUM_CLASSES)
    assert jnp.allclose(out3, ref_fwd(x3), atol=1e-4, rtol=1e-4), (
        float(jnp.max(jnp.abs(out3 - ref_fwd(x3)))))

    # Optional bf16-streaming path (halves HBM traffic; looser tolerance).
    _, (w1b, b1b, w2b, b2b) = init_params(kp, param_dtype=jnp.bfloat16)
    out_bf = jax.block_until_ready(
        nn_forward(x3.astype(jnp.bfloat16), w1b, b1b, w2b, b2b))
    assert out_bf.shape == (batch3, NUM_CLASSES)
    assert jnp.allclose(out_bf.astype(jnp.float32), ref_fwd(x3),
                        atol=3e-2, rtol=3e-2), (
        float(jnp.max(jnp.abs(out_bf.astype(jnp.float32) - ref_fwd(x3)))))

    print("KERNEL_OK")
</pallas_src>

<mosaic_0001>
module attributes {stable_mosaic.version = 11 : i64} {
  func.func @mlp_kernel(%arg0: i32, %arg1: memref<16x784xf32, #tpu.memory_space<vmem>>, %arg2: memref<784x64xf32, #tpu.memory_space<vmem>>, %arg3: memref<1x64xf32, #tpu.memory_space<vmem>>, %arg4: memref<64x128xf32, #tpu.memory_space<vmem>>, %arg5: memref<1x128xf32, #tpu.memory_space<vmem>>, %arg6: memref<16x128xf32, #tpu.memory_space<vmem>>) attributes {dimension_semantics = [#tpu.dimension_semantics<parallel>], iteration_bounds = array<i64: 1>, scalar_prefetch = 0 : i64, scratch_operands = 0 : i64, tpu.core_type = #tpu.core_type<tc>, window_params = [{transform_indices = @transform_0, window_bounds = array<i64: 16, 784>}, {pipeline_mode = #tpu.pipeline_mode<synchronous>, transform_indices = @transform_1, window_bounds = array<i64: 784, 64>}, {pipeline_mode = #tpu.pipeline_mode<synchronous>, transform_indices = @transform_2, window_bounds = array<i64: 1, 64>}, {pipeline_mode = #tpu.pipeline_mode<synchronous>, transform_indices = @transform_3, window_bounds = array<i64: 64, 128>}, {pipeline_mode = #tpu.pipeline_mode<synchronous>, transform_indices = @transform_4, window_bounds = array<i64: 1, 128>}, {transform_indices = @transform_5, window_bounds = array<i64: 16, 128>}]} {
    %c0 = arith.constant 0 : index
    %c0_0 = arith.constant 0 : index
    %0 = vector.load %arg1[%c0, %c0_0] : memref<16x784xf32, #tpu.memory_space<vmem>>, vector<16x784xf32>
    %c0_1 = arith.constant 0 : index
    %c0_2 = arith.constant 0 : index
    %1 = vector.load %arg2[%c0_1, %c0_2] : memref<784x64xf32, #tpu.memory_space<vmem>>, vector<784x64xf32>
    %cst = arith.constant dense<0.000000e+00> : vector<16x64xf32>
    %2 = tpu.matmul %0, %1, %cst {dimension_numbers = #tpu.dot_dimension_numbers<[1], [0], [0], [1], [0, 0, 1, 1], [], []>} : vector<16x784xf32>, vector<784x64xf32>, vector<16x64xf32> -> vector<16x64xf32>
    %c0_3 = arith.constant 0 : index
    %c0_4 = arith.constant 0 : index
    %3 = vector.load %arg3[%c0_3, %c0_4] : memref<1x64xf32, #tpu.memory_space<vmem>>, vector<1x64xf32>
    %4 = vector.broadcast %3 : vector<1x64xf32> to vector<16x64xf32>
    %5 = arith.addf %2, %4 : vector<16x64xf32>
    %cst_5 = arith.constant 0.000000e+00 : f32
    %6 = vector.broadcast %cst_5 : f32 to vector<16x64xf32>
    %7 = arith.maximumf %5, %6 : vector<16x64xf32>
    %c0_6 = arith.constant 0 : index
    %c0_7 = arith.constant 0 : index
    %8 = vector.load %arg4[%c0_6, %c0_7] : memref<64x128xf32, #tpu.memory_space<vmem>>, vector<64x128xf32>
    %cst_8 = arith.constant dense<0.000000e+00> : vector<16x128xf32>
    %9 = tpu.matmul %7, %8, %cst_8 {dimension_numbers = #tpu.dot_dimension_numbers<[1], [0], [0], [1], [0, 0, 1, 1], [], []>} : vector<16x64xf32>, vector<64x128xf32>, vector<16x128xf32> -> vector<16x128xf32>
    %c0_9 = arith.constant 0 : index
    %c0_10 = arith.constant 0 : index
    %10 = vector.load %arg5[%c0_9, %c0_10] : memref<1x128xf32, #tpu.memory_space<vmem>>, vector<1x128xf32>
    %11 = vector.broadcast %10 : vector<1x128xf32> to vector<16x128xf32>
    %12 = arith.addf %9, %11 : vector<16x128xf32>
    %c0_11 = arith.constant 0 : index
    %c0_12 = arith.constant 0 : index
    %13 = vector.load %arg6[%c0_11, %c0_12] : memref<16x128xf32, #tpu.memory_space<vmem>>, vector<16x128xf32>
    tpu.vector_store %arg6[%c0_11, %c0_12], %12 {strides = array<i32>} : memref<16x128xf32, #tpu.memory_space<vmem>>, vector<16x128xf32>,
    return
  }
  func.func @transform_0(%arg0: i32) -> (i32, i32) {
    %c0_i32 = arith.constant 0 : i32
    %c0_i32_0 = arith.constant 0 : i32
    return %arg0, %c0_i32 : i32, i32
  }
  func.func @transform_1(%arg0: i32) -> (i32, i32) {
    %c0_i32 = arith.constant 0 : i32
    %c0_i32_0 = arith.constant 0 : i32
    %c0_i32_1 = arith.constant 0 : i32
    return %c0_i32, %c0_i32_0 : i32, i32
  }
  func.func @transform_2(%arg0: i32) -> (i32, i32) {
    %c0_i32 = arith.constant 0 : i32
    %c0_i32_0 = arith.constant 0 : i32
    %c0_i32_1 = arith.constant 0 : i32
    return %c0_i32, %c0_i32_0 : i32, i32
  }
  func.func @transform_3(%arg0: i32) -> (i32, i32) {
    %c0_i32 = arith.constant 0 : i32
    %c0_i32_0 = arith.constant 0 : i32
    %c0_i32_1 = arith.constant 0 : i32
    return %c0_i32, %c0_i32_0 : i32, i32
  }
  func.func @transform_4(%arg0: i32) -> (i32, i32) {
    %c0_i32 = arith.constant 0 : i32
    %c0_i32_0 = arith.constant 0 : i32
    %c0_i32_1 = arith.constant 0 : i32
    return %c0_i32, %c0_i32_0 : i32, i32
  }
  func.func @transform_5(%arg0: i32) -> (i32, i32) {
    %c0_i32 = arith.constant 0 : i32
    %c0_i32_0 = arith.constant 0 : i32
    return %arg0, %c0_i32 : i32, i32
  }
}

</mosaic_0001>

<llo_original>
// kernel: nn_forward.1
$region0: #{nn_forward.1}
  #allocation0 [shape = 'u32[]', space=smem, size = 0x4, offset = 0x4, fixed_abs, tag = 'smem constant byte address 0x4 - core index']
  #allocation1 [shape = 'u32[72,128]{1,0:T(1,128)}', space=vmem, size = 0x9000, scoped, tag = 'internal scratch']
  %s0 = inlined_call_operand.vmem [shape: f32[16,784], index: 0, kind: input, shape index: {}]
  %s1 = inlined_call_operand.vmem [shape: f32[784,64], index: 1, kind: input, shape index: {}]
  %s2 = inlined_call_operand.vmem [shape: f32[1,64], index: 2, kind: input, shape index: {}]
  %s3 = inlined_call_operand.vmem [shape: f32[64,128], index: 3, kind: input, shape index: {}]
  %s4 = inlined_call_operand.vmem [shape: f32[1,128], index: 4, kind: input, shape index: {}]
  %s5 = inlined_call_operand.vmem [shape: f32[16,128], index: 5, kind: output, shape index: {}]
  %s6 = sld [smem:[#allocation0]]
  $region30: #{nn_forward.1} parent=0
    _
  %s8 = ssub.s32 1, %s6
  %s9 = scalar_select 0, %s8, %s6
  // Predicated region
  $region2: #{nn_forward.1} parent=0 // pred_check
    _
  $region3: #{nn_forward.1} parent=0 // pred_check_branch
    %11 = sbr.rel (0) target = $region5
  $region4: #{nn_forward.1} parent=0 // pred_region
    _
  $region5: #{nn_forward.1} parent=0 // pred_fallthru
    _
  // Predicated region
  $region6: #{nn_forward.1} parent=0 // pred_check
    _
  $region7: #{nn_forward.1} parent=0 // pred_check_branch
    %13 = sbr.rel (0) target = $region9
  $region8: #{nn_forward.1} parent=0 // pred_region
    _
  $region9: #{nn_forward.1} parent=0 // pred_fallthru
    _
  // Predicated region
  $region10: #{nn_forward.1} parent=0 // pred_check
    _
  $region11: #{nn_forward.1} parent=0 // pred_check_branch
    %15 = sbr.rel (0) target = $region13
  $region12: #{nn_forward.1} parent=0 // pred_region
    _
  $region13: #{nn_forward.1} parent=0 // pred_fallthru
    _
  // Predicated region
  $region14: #{nn_forward.1} parent=0 // pred_check
    _
  $region15: #{nn_forward.1} parent=0 // pred_check_branch
    %17 = sbr.rel (0) target = $region17
  $region16: #{nn_forward.1} parent=0 // pred_region
    _
  $region17: #{nn_forward.1} parent=0 // pred_fallthru
    _
  // Predicated region
  $region18: #{nn_forward.1} parent=0 // pred_check
    _
  $region19: #{nn_forward.1} parent=0 // pred_check_branch
    %19 = sbr.rel (0) target = $region21
  $region20: #{nn_forward.1} parent=0 // pred_region
    _
  $region21: #{nn_forward.1} parent=0 // pred_fallthru
    _
  %v20 = vld [vmem:[%s0] sm:$0xff]
  %v21 = vld [vmem:[%s0 + $0x8] sm:$0xff]
  %v22 = vld [vmem:[%s0 + $0x10] sm:$0xff]
  %v23 = vld [vmem:[%s0 + $0x18] sm:$0xff]
  %v24 = vld [vmem:[%s0 + $0x20] sm:$0xff]
  %v25 = vld [vmem:[%s0 + $0x28] sm:$0xff]
  %v26 = vld [vmem:[%s0 + $0x30] sm:$0xff]
  %v27 = vld [vmem:[%s0 + $0x38] sm:$0xff]
  %v28 = vld [vmem:[%s0 + $0x40] sm:$0xff]
  %v29 = vld [vmem:[%s0 + $0x48] sm:$0xff]
  %v30 = vld [vmem:[%s0 + $0x50] sm:$0xff]
  %v31 = vld [vmem:[%s0 + $0x58] sm:$0xff]
  %v32 = vld [vmem:[%s0 + $0x60] sm:$0xff]
  %v33 = vld [vmem:[%s0 + $0x68] sm:$0xff]
  %v34 = vld [vmem:[%s1] sm:$0xff]
  %v35 = vld [vmem:[%s1 + $0x8] sm:$0xff]
  %v36 = vld [vmem:[%s1 + $0x10] sm:$0xff]
  %v37 = vld [vmem:[%s1 + $0x18] sm:$0xff]
  %v38 = vld [vmem:[%s1 + $0x20] sm:$0xff]
  %v39 = vld [vmem:[%s1 + $0x28] sm:$0xff]
  %v40 = vld [vmem:[%s1 + $0x30] sm:$0xff]
  %v41 = vld [vmem:[%s1 + $0x38] sm:$0xff]
  %v42 = vld [vmem:[%s1 + $0x40] sm:$0xff]
  %v43 = vld [vmem:[%s1 + $0x48] sm:$0xff]
  %v44 = vld [vmem:[%s1 + $0x50] sm:$0xff]
  %v45 = vld [vmem:[%s1 + $0x58] sm:$0xff]
  %v46 = vld [vmem:[%s1 + $0x60] sm:$0xff]
  %v47 = vld [vmem:[%s1 + $0x68] sm:$0xff]
  %v48 = vld [vmem:[%s1 + $0x70] sm:$0xff]
  %v49 = vld [vmem:[%s1 + $0x78] sm:$0xff]
  %v50 = vld [vmem:[%s1 + $0x80] sm:$0xff]
  %v51 = vld [vmem:[%s1 + $0x88] sm:$0xff]
  %v52 = vld [vmem:[%s1 + $0x90] sm:$0xff]
  %v53 = vld [vmem:[%s1 + $0x98] sm:$0xff]
  %v54 = vld [vmem:[%s1 + $0xa0] sm:$0xff]
  %v55 = vld [vmem:[%s1 + $0xa8] sm:$0xff]
  %v56 = vld [vmem:[%s1 + $0xb0] sm:$0xff]
  %v57 = vld [vmem:[%s1 + $0xb8] sm:$0xff]
  %v58 = vld [vmem:[%s1 + $0xc0] sm:$0xff]
  %v59 = vld [vmem:[%s1 + $0xc8] sm:$0xff]
  %v60 = vld [vmem:[%s1 + $0xd0] sm:$0xff]
  %v61 = vld [vmem:[%s1 + $0xd8] sm:$0xff]
  %v62 = vld [vmem:[%s1 + $0xe0] sm:$0xff]
  %v63 = vld [vmem:[%s1 + $0xe8] sm:$0xff]
  %v64 = vld [vmem:[%s1 + $0xf0] sm:$0xff]
  %v65 = vld [vmem:[%s1 + $0xf8] sm:$0xff]
  %v66 = vld [vmem:[%s1 + $0x100] sm:$0xff]
  %v67 = vld [vmem:[%s1 + $0x108] sm:$0xff]
  %v68 = vld [vmem:[%s1 + $0x110] sm:$0xff]
  %v69 = vld [vmem:[%s1 + $0x118] sm:$0xff]
  %v70 = vld [vmem:[%s1 + $0x120] sm:$0xff]
  %v71 = vld [vmem:[%s1 + $0x128] sm:$0xff]
  %v72 = vld [vmem:[%s1 + $0x130] sm:$0xff]
  %v73 = vld [vmem:[%s1 + $0x138] sm:$0xff]
  %v74 = vld [vmem:[%s1 + $0x140] sm:$0xff]
  %v75 = vld [vmem:[%s1 + $0x148] sm:$0xff]
  %v76 = vld [vmem:[%s1 + $0x150] sm:$0xff]
  %v77 = vld [vmem:[%s1 + $0x158] sm:$0xff]
  %v78 = vld [vmem:[%s1 + $0x160] sm:$0xff]
  %v79 = vld [vmem:[%s1 + $0x168] sm:$0xff]
  %v80 = vld [vmem:[%s1 + $0x170] sm:$0xff]
  %v81 = vld [vmem:[%s1 + $0x178] sm:$0xff]
  %v82 = vld [vmem:[%s1 + $0x180] sm:$0xff]
  %v83 = vld [vmem:[%s1 + $0x188] sm:$0xff]
  %v84 = vld [vmem:[%s1 + $0x190] sm:$0xff]
  %v85 = vld [vmem:[%s1 + $0x198] sm:$0xff]
  %v86 = vld [vmem:[%s1 + $0x1a0] sm:$0xff]
  %v87 = vld [vmem:[%s1 + $0x1a8] sm:$0xff]
  %v88 = vld [vmem:[%s1 + $0x1b0] sm:$0xff]
  %v89 = vld [vmem:[%s1 + $0x1b8] sm:$0xff]
  %v90 = vld [vmem:[%s1 + $0x1c0] sm:$0xff]
  %v91 = vld [vmem:[%s1 + $0x1c8] sm:$0xff]
  %v92 = vld [vmem:[%s1 + $0x1d0] sm:$0xff]
  %v93 = vld [vmem:[%s1 + $0x1d8] sm:$0xff]
  %v94 = vld [vmem:[%s1 + $0x1e0] sm:$0xff]
  %v95 = vld [vmem:[%s1 + $0x1e8] sm:$0xff]
  %v96 = vld [vmem:[%s1 + $0x1f0] sm:$0xff]
  %v97 = vld [vmem:[%s1 + $0x1f8] sm:$0xff]
  %v98 = vld [vmem:[%s1 + $0x200] sm:$0xff]
  %v99 = vld [vmem:[%s1 + $0x208] sm:$0xff]
  %v100 = vld [vmem:[%s1 + $0x210] sm:$0xff]
  %v101 = vld [vmem:[%s1 + $0x218] sm:$0xff]
  %v102 = vld [vmem:[%s1 + $0x220] sm:$0xff]
  %v103 = vld [vmem:[%s1 + $0x228] sm:$0xff]
  %v104 = vld [vmem:[%s1 + $0x230] sm:$0xff]
  %v105 = vld [vmem:[%s1 + $0x238] sm:$0xff]
  %v106 = vld [vmem:[%s1 + $0x240] sm:$0xff]
  %v107 = vld [vmem:[%s1 + $0x248] sm:$0xff]
  %v108 = vld [vmem:[%s1 + $0x250] sm:$0xff]
  %v109 = vld [vmem:[%s1 + $0x258] sm:$0xff]
  %v110 = vld [vmem:[%s1 + $0x260] sm:$0xff]
  %v111 = vld [vmem:[%s1 + $0x268] sm:$0xff]
  %v112 = vld [vmem:[%s1 + $0x270] sm:$0xff]
  %v113 = vld [vmem:[%s1 + $0x278] sm:$0xff]
  %v114 = vld [vmem:[%s1 + $0x280] sm:$0xff]
  %v115 = vld [vmem:[%s1 + $0x288] sm:$0xff]
  %v116 = vld [vmem:[%s1 + $0x290] sm:$0xff]
  %v117 = vld [vmem:[%s1 + $0x298] sm:$0xff]
  %v118 = vld [vmem:[%s1 + $0x2a0] sm:$0xff]
  %v119 = vld [vmem:[%s1 + $0x2a8] sm:$0xff]
  %v120 = vld [vmem:[%s1 + $0x2b0] sm:$0xff]
  %v121 = vld [vmem:[%s1 + $0x2b8] sm:$0xff]
  %v122 = vld [vmem:[%s1 + $0x2c0] sm:$0xff]
  %v123 = vld [vmem:[%s1 + $0x2c8] sm:$0xff]
  %v124 = vld [vmem:[%s1 + $0x2d0] sm:$0xff]
  %v125 = vld [vmem:[%s1 + $0x2d8] sm:$0xff]
  %v126 = vld [vmem:[%s1 + $0x2e0] sm:$0xff]
  %v127 = vld [vmem:[%s1 + $0x2e8] sm:$0xff]
  %v128 = vld [vmem:[%s1 + $0x2f0] sm:$0xff]
  %v129 = vld [vmem:[%s1 + $0x2f8] sm:$0xff]
  %v130 = vld [vmem:[%s1 + $0x300] sm:$0xff]
  %v131 = vld [vmem:[%s1 + $0x308] sm:$0xff]
  %v132 = vld [vmem:[%s2] sm:$0x1]
  %v134 = vperm.slane %v132, 0
  %vm136 = vcmask 130048
  %v138 = vsel %vm136, %v26, 0
  %v141 = vsel %vm136, %v33, 0
  %143 = vmatpush.msra.mxu0 %v49
  %144 = vmatpush.msra.mxu0 %v48
  %145 = vmatpush.msra.mxu0 %v47
  %146 = vmatpush.msra.mxu0 %v46
  %147 = vmatpush.msra.mxu0 %v45
  %148 = vmatpush.msra.mxu0 %v44
  %149 = vmatpush.msra.mxu0 %v43
  %150 = vmatpush.msra.mxu0 %v42
  %151 = vmatpush.msra.mxu0 %v41
  %152 = vmatpush.msra.mxu0 %v40
  %153 = vmatpush.msra.mxu0 %v39
  %154 = vmatpush.msra.mxu0 %v38
  %155 = vmatpush.msra.mxu0 %v37
  %156 = vmatpush.msra.mxu0 %v36
  %157 = vmatpush.msra.mxu0 %v35
  %158 = vmatpush.msra.mxu0 %v34
  %159 = vmatmul.f32.gmra.mxu0 %v20
  %v160 = vpop.f32.mrf.mxu0
  %v161 = vadd.f32 %v134, %v160
  %162 = vmatmul.f32.gmra.mxu0 %v27
  %v163 = vpop.f32.mrf.mxu0
  %v164 = vadd.f32 %v134, %v163
  %165 = vdwg.mxu0
  %166 = vmatpush.msra.mxu0 %v65
  %167 = vmatpush.msra.mxu0 %v64
  %168 = vmatpush.msra.mxu0 %v63
  %169 = vmatpush.msra.mxu0 %v62
  %170 = vmatpush.msra.mxu0 %v61
  %171 = vmatpush.msra.mxu0 %v60
  %172 = vmatpush.msra.mxu0 %v59
  %173 = vmatpush.msra.mxu0 %v58
  %174 = vmatpush.msra.mxu0 %v57
  %175 = vmatpush.msra.mxu0 %v56
  %176 = vmatpush.msra.mxu0 %v55
  %177 = vmatpush.msra.mxu0 %v54
  %178 = vmatpush.msra.mxu0 %v53
  %179 = vmatpush.msra.mxu0 %v52
  %180 = vmatpush.msra.mxu0 %v51
  %181 = vmatpush.msra.mxu0 %v50
  %182 = vmatmul.f32.gmra.mxu0 %v21
  %v183 = vpop.f32.mrf.mxu0
  %v184 = vadd.f32 %v161, %v183
  %185 = vmatmul.f32.gmra.mxu0 %v28
  %v186 = vpop.f32.mrf.mxu0
  %v187 = vadd.f32 %v164, %v186
  %188 = vdwg.mxu0
  %189 = vmatpush.msra.mxu0 %v81
  %190 = vmatpush.msra.mxu0 %v80
  %191 = vmatpush.msra.mxu0 %v79
  %192 = vmatpush.msra.mxu0 %v78
  %193 = vmatpush.msra.mxu0 %v77
  %194 = vmatpush.msra.mxu0 %v76
  %195 = vmatpush.msra.mxu0 %v75
  %196 = vmatpush.msra.mxu0 %v74
  %197 = vmatpush.msra.mxu0 %v73
  %198 = vmatpush.msra.mxu0 %v72
  %199 = vmatpush.msra.mxu0 %v71
  %200 = vmatpush.msra.mxu0 %v70
  %201 = vmatpush.msra.mxu0 %v69
  %202 = vmatpush.msra.mxu0 %v68
  %203 = vmatpush.msra.mxu0 %v67
  %204 = vmatpush.msra.mxu0 %v66
  %205 = vmatmul.f32.gmra.mxu0 %v22
  %v206 = vpop.f32.mrf.mxu0
  %v207 = vadd.f32 %v184, %v206
  %208 = vmatmul.f32.gmra.mxu0 %v29
  %v209 = vpop.f32.mrf.mxu0
  %v210 = vadd.f32 %v187, %v209
  %211 = vdwg.mxu0
  %212 = vmatpush.msra.mxu0 %v97
  %213 = vmatpush.msra.mxu0 %v96
  %214 = vmatpush.msra.mxu0 %v95
  %215 = vmatpush.msra.mxu0 %v94
  %216 = vmatpush.msra.mxu0 %v93
  %217 = vmatpush.msra.mxu0 %v92
  %218 = vmatpush.msra.mxu0 %v91
  %219 = vmatpush.msra.mxu0 %v90
  %220 = vmatpush.msra.mxu0 %v89
  %221 = vmatpush.msra.mxu0 %v88
  %222 = vmatpush.msra.mxu0 %v87
  %223 = vmatpush.msra.mxu0 %v86
  %224 = vmatpush.msra.mxu0 %v85
  %225 = vmatpush.msra.mxu0 %v84
  %226 = vmatpush.msra.mxu0 %v83
  %227 = vmatpush.msra.mxu0 %v82
  %228 = vmatmul.f32.gmra.mxu0 %v23
  %v229 = vpop.f32.mrf.mxu0
  %v230 = vadd.f32 %v207, %v229
  %231 = vmatmul.f32.gmra.mxu0 %v30
  %v232 = vpop.f32.mrf.mxu0
  %v233 = vadd.f32 %v210, %v232
  %234 = vdwg.mxu0
  %235 = vmatpush.msra.mxu0 %v113
  %236 = vmatpush.msra.mxu0 %v112
  %237 = vmatpush.msra.mxu0 %v111
  %238 = vmatpush.msra.mxu0 %v110
  %239 = vmatpush.msra.mxu0 %v109
  %240 = vmatpush.msra.mxu0 %v108
  %241 = vmatpush.msra.mxu0 %v107
  %242 = vmatpush.msra.mxu0 %v106
  %243 = vmatpush.msra.mxu0 %v105
  %244 = vmatpush.msra.mxu0 %v104
  %245 = vmatpush.msra.mxu0 %v103
  %246 = vmatpush.msra.mxu0 %v102
  %247 = vmatpush.msra.mxu0 %v101
  %248 = vmatpush.msra.mxu0 %v100
  %249 = vmatpush.msra.mxu0 %v99
  %250 = vmatpush.msra.mxu0 %v98
  %251 = vmatmul.f32.gmra.mxu0 %v24
  %v252 = vpop.f32.mrf.mxu0
  %v253 = vadd.f32 %v230, %v252
  %254 = vmatmul.f32.gmra.mxu0 %v31
  %v255 = vpop.f32.mrf.mxu0
  %v256 = vadd.f32 %v233, %v255
  %257 = vdwg.mxu0
  %258 = vmatpush.msra.mxu0 %v129
  %259 = vmatpush.msra.mxu0 %v128
  %260 = vmatpush.msra.mxu0 %v127
  %261 = vmatpush.msra.mxu0 %v126
  %262 = vmatpush.msra.mxu0 %v125
  %263 = vmatpush.msra.mxu0 %v124
  %264 = vmatpush.msra.mxu0 %v123
  %265 = vmatpush.msra.mxu0 %v122
  %266 = vmatpush.msra.mxu0 %v121
  %267 = vmatpush.msra.mxu0 %v120
  %268 = vmatpush.msra.mxu0 %v119
  %269 = vmatpush.msra.mxu0 %v118
  %270 = vmatpush.msra.mxu0 %v117
  %271 = vmatpush.msra.mxu0 %v116
  %272 = vmatpush.msra.mxu0 %v115
  %273 = vmatpush.msra.mxu0 %v114
  %274 = vmatmul.f32.gmra.mxu0 %v25
  %v275 = vpop.f32.mrf.mxu0
  %v276 = vadd.f32 %v253, %v275
  %277 = vmatmul.f32.gmra.mxu0 %v32
  %v278 = vpop.f32.mrf.mxu0
  %v279 = vadd.f32 %v256, %v278
  %280 = vdwg.mxu0
  %281 = vmatpush.msra.mxu0 0.0
  %282 = vmatpush.msra.mxu0 0.0
  %283 = vmatpush.msra.mxu0 0.0
  %284 = vmatpush.msra.mxu0 0.0
  %285 = vmatpush.msra.mxu0 0.0
  %286 = vmatpush.msra.mxu0 0.0
  %287 = vmatpush.msra.mxu0 0.0
  %288 = vmatpush.msra.mxu0 0.0
  %289 = vmatpush.msra.mxu0 0.0
  %290 = vmatpush.msra.mxu0 0.0
  %291 = vmatpush.msra.mxu0 0.0
  %292 = vmatpush.msra.mxu0 0.0
  %293 = vmatpush.msra.mxu0 0.0
  %294 = vmatpush.msra.mxu0 0.0
  %295 = vmatpush.msra.mxu0 %v131
  %296 = vmatpush.msra.mxu0 %v130
  %297 = vmatmul.f32.gmra.mxu0 %v138
  %v298 = vpop.f32.mrf.mxu0
  %v299 = vadd.f32 %v276, %v298
  %300 = vmatmul.f32.gmra.mxu0 %v141
  %v301 = vpop.f32.mrf.mxu0
  %v302 = vadd.f32 %v279, %v301
  %303 = vdwg.mxu0
  %v304 = vmax.f32 %v299, 0.0
  %v305 = vmax.f32 %v302, 0.0
  %v306 = vld [vmem:[%s3] sm:$0xff]
  %v307 = vld [vmem:[%s3 + $0x8] sm:$0xff]
  %v308 = vld [vmem:[%s3 + $0x10] sm:$0xff]
  %v309 = vld [vmem:[%s3 + $0x18] sm:$0xff]
  %v310 = vld [vmem:[%s3 + $0x20] sm:$0xff]
  %v311 = vld [vmem:[%s3 + $0x28] sm:$0xff]
  %v312 = vld [vmem:[%s3 + $0x30] sm:$0xff]
  %v313 = vld [vmem:[%s3 + $0x38] sm:$0xff]
  %v314 = vld [vmem:[%s4] sm:$0x1]
  %v316 = vperm.slane %v314, 0
  %vm318 = vcmask 523264
  %v320 = vsel %vm318, %v304, 0
  %v323 = vsel %vm318, %v305, 0
  %325 = vmatpush.msra.mxu0 0.0
  %326 = vmatpush.msra.mxu0 0.0
  %327 = vmatpush.msra.mxu0 0.0
  %328 = vmatpush.msra.mxu0 0.0
  %329 = vmatpush.msra.mxu0 0.0
  %330 = vmatpush.msra.mxu0 0.0
  %331 = vmatpush.msra.mxu0 0.0
  %332 = vmatpush.msra.mxu0 0.0
  %333 = vmatpush.msra.mxu0 %v313
  %334 = vmatpush.msra.mxu0 %v312
  %335 = vmatpush.msra.mxu0 %v311
  %336 = vmatpush.msra.mxu0 %v310
  %337 = vmatpush.msra.mxu0 %v309
  %338 = vmatpush.msra.mxu0 %v308
  %339 = vmatpush.msra.mxu0 %v307
  %340 = vmatpush.msra.mxu0 %v306
  %341 = vmatmul.f32.gmra.mxu0 %v320
  %v342 = vpop.f32.mrf.mxu0
  %v343 = vadd.f32 %v316, %v342
  %344 = vmatmul.f32.gmra.mxu0 %v323
  %v345 = vpop.f32.mrf.mxu0
  %v346 = vadd.f32 %v316, %v345
  %347 = vdwg.mxu0
  %348 = vst [vmem:[%s5] sm:$0xff] %v343
  %349 = vst [vmem:[%s5 + $0x8] sm:$0xff] %v346
  // Predicated region
  $region22: #{nn_forward.1} parent=0 // pred_check
    _
  $region23: #{nn_forward.1} parent=0 // pred_check_branch
    %351 = sbr.rel (0) target = $region25
  $region24: #{nn_forward.1} parent=0 // pred_region
    _
  $region25: #{nn_forward.1} parent=0 // pred_fallthru
    _
  // Predicated region
  $region26: #{nn_forward.1} parent=0 // pred_check
    _
  $region27: #{nn_forward.1} parent=0 // pred_check_branch
    %353 = sbr.rel (0) target = $region29
  $region28: #{nn_forward.1} parent=0 // pred_region
    _
  $region29: #{nn_forward.1} parent=0 // pred_fallthru
    _

</llo_original>
